<compile_context>
chip_gen: v7x
topology: tpu7x:2x2x1
jax: 0.10.0
libtpu: 0.0.40
codegen_flags: <defaults>
</compile_context>

<pallas_src>
import jax
import jax.numpy as jnp
from jax import lax
from jax.experimental import pallas as pl
from jax.experimental.pallas import tpu as pltpu


# ------------------------------- kernels ------------------------------------


def _xw_kernel(x_ref, w_ref, o_ref):
    """o = x_block @ W1   (bf16 operands, f32 accumulation, bf16 output)."""
    o_ref[...] = jnp.dot(
        x_ref[...], w_ref[...], preferred_element_type=jnp.float32
    ).astype(o_ref.dtype)


def _agg_relu_xw_kernel(a_ref, xw_ref, b_ref, w2_ref, o_ref, acc_ref):
    """K-tiled: acc += a_tile @ xw_tile; epilogue: o = ReLU(acc + b1) @ W2."""
    k = pl.program_id(1)

    @pl.when(k == 0)
    def _():
        acc_ref[...] = jnp.zeros_like(acc_ref)

    acc_ref[...] += jnp.dot(
        a_ref[...], xw_ref[...], preferred_element_type=jnp.float32
    )

    @pl.when(k == pl.num_programs(1) - 1)
    def _():
        h = jnp.maximum(acc_ref[...] + b_ref[...], jnp.float32(0.0))
        o_ref[...] = jnp.dot(
            h.astype(w2_ref.dtype), w2_ref[...],
            preferred_element_type=jnp.float32,
        ).astype(o_ref.dtype)


def _agg_bias_kernel(a_ref, hw_ref, b_ref, o_ref, acc_ref):
    """K-tiled: acc += a_tile @ hw_tile; epilogue: o = acc + b2 (f32)."""
    k = pl.program_id(1)

    @pl.when(k == 0)
    def _():
        acc_ref[...] = jnp.zeros_like(acc_ref)

    acc_ref[...] += jnp.dot(
        a_ref[...], hw_ref[...], preferred_element_type=jnp.float32
    )

    @pl.when(k == pl.num_programs(1) - 1)
    def _():
        o_ref[...] = acc_ref[...] + b_ref[...]


# ------------------------------- helpers ------------------------------------


def _round_up(x, m):
    return ((x + m - 1) // m) * m


def _pad2d(a, rows, cols):
    return jnp.pad(a, ((0, rows - a.shape[0]), (0, cols - a.shape[1])))


def _vmem_limit(tm, tk, f_pad, h_pad):
    """Tile working set of the heaviest (aggregation) call, 2x headroom,
    capped at 48 MiB so we never budget all of v7x's 64 MiB physical VMEM."""
    bf16 = 2
    est = (
        2 * tm * tk * bf16                    # A tile (double-buffered)
        + 2 * tk * h_pad * bf16               # XW / HW tile (double-buffered)
        + 2 * tm * max(f_pad, h_pad) * bf16   # row in/out block (double-buffered)
        + 2 * h_pad * h_pad * bf16            # W2 (constant index, 2 bufs)
        + tm * h_pad * 4                      # f32 accumulator scratch
        + 4 * h_pad * 4                       # biases
    )
    return int(min(48 * 2**20, max(16 * 2**20, 2 * est)))


def _build_normalized_adjacency(n, n_pad, edge_index):
    """Dense A_hat with PyG gcn_norm semantics, built directly at padded size.

    Padded rows/cols stay zero (degree 0 -> d^{-1/2} = 0), so they never
    contaminate real rows and are sliced off at the end.

    # TODO(synk): for large sparse graphs replace this dense O(N^2) adjacency
    # with a scalar-prefetched CSR gather / segment-sum aggregation kernel,
    # and cache A_hat across forward calls instead of rebuilding it.
    """
    src = edge_index[0]
    dst = edge_index[1]
    adj = jnp.zeros((n_pad, n_pad), dtype=jnp.float32).at[dst, src].add(1.0)
    diag = jnp.diagonal(adj)
    # add_remaining_self_loops: only real nodes without an existing self-loop.
    need_loop = (jnp.arange(n_pad) < n) & (diag <= 0.0)
    adj = adj + jnp.diag(jnp.where(need_loop, 1.0, 0.0))
    deg = jnp.sum(adj, axis=1)
    d_inv_sqrt = jnp.where(deg > 0.0, lax.rsqrt(deg), 0.0)
    return d_inv_sqrt[:, None] * adj * d_inv_sqrt[None, :]


# ------------------------------- forward ------------------------------------


def gnn_encoder_forward(x, edge_index, w1, b1, w2, b2, *,
                        block_rows=256, block_k=512):
    """x: [N, F] float32, edge_index: [2, E] int32 (row 0 = src, row 1 = dst)."""
    n, f_in = x.shape
    hidden = w2.shape[1]

    # --- tiling geometry (bf16 sublane packing => multiples of 16) ---
    tm = min(block_rows, _round_up(n, 16))          # row tile
    tk = tm * max(1, min(block_k // tm, pl.cdiv(n, tm)))  # reduction tile (mult of tm)
    n_pad = _round_up(n, tk)                        # divisible by tm and tk
    f_pad = _round_up(f_in, 128)                    # lane-dense feature dim
    h_pad = _round_up(hidden, 128)                  # lane-dense hidden dim
    grid_rows = n_pad // tm
    grid_k = n_pad // tk

    # --- operands: single f32 build of A_hat at padded size, one bf16 cast ---
    a_p = _build_normalized_adjacency(n, n_pad, edge_index).astype(jnp.bfloat16)
    x_p = _pad2d(x.astype(jnp.bfloat16), n_pad, f_pad)
    w1_p = _pad2d(w1.astype(jnp.bfloat16), f_pad, h_pad)
    w2_p = _pad2d(w2.astype(jnp.bfloat16), h_pad, h_pad)
    b1_p = _pad2d(b1.reshape(1, -1).astype(jnp.float32), 1, h_pad)
    b2_p = _pad2d(b2.reshape(1, -1).astype(jnp.float32), 1, h_pad)

    vmem_bytes = _vmem_limit(tm, tk, f_pad, h_pad)
    params_1d = pltpu.CompilerParams(
        dimension_semantics=("parallel",), vmem_limit_bytes=vmem_bytes)
    params_2d = pltpu.CompilerParams(
        dimension_semantics=("parallel", "arbitrary"),
        vmem_limit_bytes=vmem_bytes)

    # --- call 1: XW1 = X @ W1  (O(N*F*H), negligible vs the aggregations) ---
    xw1 = pl.pallas_call(
        _xw_kernel,
        out_shape=jax.ShapeDtypeStruct((n_pad, h_pad), jnp.bfloat16),
        grid=(grid_rows,),
        in_specs=[
            pl.BlockSpec((tm, f_pad), lambda i: (i, 0)),
            pl.BlockSpec((f_pad, h_pad), lambda i: (0, 0)),
        ],
        out_specs=pl.BlockSpec((tm, h_pad), lambda i: (i, 0)),
        compiler_params=params_1d,
        cost_estimate=pl.CostEstimate(
            flops=2 * n_pad * f_pad * h_pad,
            transcendentals=0,
            bytes_accessed=2 * (n_pad * f_pad + f_pad * h_pad + n_pad * h_pad),
        ),
    )(x_p, w1_p)

    # --- call 2: HW2 = ReLU(A @ XW1 + b1) @ W2   (K-tiled aggregation) ---
    hw2 = pl.pallas_call(
        _agg_relu_xw_kernel,
        out_shape=jax.ShapeDtypeStruct((n_pad, h_pad), jnp.bfloat16),
        grid=(grid_rows, grid_k),
        in_specs=[
            pl.BlockSpec((tm, tk), lambda i, k: (i, k)),
            pl.BlockSpec((tk, h_pad), lambda i, k: (k, 0)),
            pl.BlockSpec((1, h_pad), lambda i, k: (0, 0)),
            pl.BlockSpec((h_pad, h_pad), lambda i, k: (0, 0)),
        ],
        out_specs=pl.BlockSpec((tm, h_pad), lambda i, k: (i, 0)),
        scratch_shapes=[pltpu.VMEM((tm, h_pad), jnp.float32)],
        compiler_params=params_2d,
        cost_estimate=pl.CostEstimate(
            flops=2 * n_pad * n_pad * h_pad + 2 * n_pad * h_pad * h_pad,
            transcendentals=0,
            bytes_accessed=2 * (n_pad * n_pad + n_pad * h_pad
                                + h_pad * h_pad + n_pad * h_pad) + 4 * h_pad,
        ),
    )(a_p, xw1, b1_p, w2_p)

    # --- call 3: OUT = A @ HW2 + b2   (K-tiled aggregation, f32 output) ---
    out_p = pl.pallas_call(
        _agg_bias_kernel,
        out_shape=jax.ShapeDtypeStruct((n_pad, h_pad), jnp.float32),
        grid=(grid_rows, grid_k),
        in_specs=[
            pl.BlockSpec((tm, tk), lambda i, k: (i, k)),
            pl.BlockSpec((tk, h_pad), lambda i, k: (k, 0)),
            pl.BlockSpec((1, h_pad), lambda i, k: (0, 0)),
        ],
        out_specs=pl.BlockSpec((tm, h_pad), lambda i, k: (i, 0)),
        scratch_shapes=[pltpu.VMEM((tm, h_pad), jnp.float32)],
        compiler_params=params_2d,
        cost_estimate=pl.CostEstimate(
            flops=2 * n_pad * n_pad * h_pad,
            transcendentals=0,
            bytes_accessed=2 * (n_pad * n_pad + n_pad * h_pad)
            + 4 * (h_pad + n_pad * h_pad),
        ),
    )(a_p, hw2, b2_p)

    return out_p[:n, :hidden]


# --------------------------- reference / init --------------------------------


def _reference_forward(x, edge_index, w1, b1, w2, b2):
    """Plain-JAX f32 reference with identical semantics (sanity check)."""
    n = x.shape[0]
    a_hat = _build_normalized_adjacency(n, n, edge_index)
    h = jnp.maximum(a_hat @ (x @ w1) + b1, 0.0)
    return a_hat @ (h @ w2) + b2


def init_params(key, input_dim, hidden_dim):
    """Deterministic Glorot-style init matching GCNConv parameter shapes."""
    k1, k2 = jax.random.split(key)
    s1 = jnp.sqrt(6.0 / (input_dim + hidden_dim))
    s2 = jnp.sqrt(6.0 / (hidden_dim + hidden_dim))
    w1 = jax.random.uniform(k1, (input_dim, hidden_dim), jnp.float32, -s1, s1)
    w2 = jax.random.uniform(k2, (hidden_dim, hidden_dim), jnp.float32, -s2, s2)
    b1 = jnp.zeros((1, hidden_dim), jnp.float32)
    b2 = jnp.zeros((1, hidden_dim), jnp.float32)
    return w1, b1, w2, b2


if __name__ == "__main__":
    key = jax.random.PRNGKey(0)
    k_x, k_e, k_p = jax.random.split(key, 3)

    num_nodes = 64
    input_dim = 32
    hidden_dim = 16
    num_edges = 128

    # deterministic node features and (undirected) edge list
    x = jax.random.normal(k_x, (num_nodes, input_dim), dtype=jnp.float32)
    e = jax.random.randint(k_e, (2, num_edges), 0, num_nodes, dtype=jnp.int32)
    edge_index = jnp.concatenate([e, e[::-1]], axis=1)  # both directions

    w1, b1, w2, b2 = init_params(k_p, input_dim, hidden_dim)

    out = gnn_encoder_forward(x, edge_index, w1, b1, w2, b2)
    jax.block_until_ready(out)

    assert out.shape == (num_nodes, hidden_dim)
    assert out.dtype == jnp.float32

    # correctness check vs f32 reference (bf16 operands => small drift);
    # scale-aware tolerance instead of a single loose absolute bound.
    ref = _reference_forward(x, edge_index, w1, b1, w2, b2)
    max_err = float(jnp.max(jnp.abs(out - ref)))
    scale = max(1.0, float(jnp.max(jnp.abs(ref))))
    assert max_err / scale < 0.05, f"relative error {max_err / scale} too large"

    print("KERNEL_OK")
</pallas_src>

<mosaic_0001>
module attributes {stable_mosaic.version = 11 : i64} {
  func.func @_xw_kernel(%arg0: i32, %arg1: memref<64x128xbf16, #tpu.memory_space<vmem>>, %arg2: memref<128x128xbf16, #tpu.memory_space<vmem>>, %arg3: memref<64x128xbf16, #tpu.memory_space<vmem>>) attributes {dimension_semantics = [#tpu.dimension_semantics<parallel>], iteration_bounds = array<i64: 1>, scalar_prefetch = 0 : i64, scratch_operands = 0 : i64, tpu.core_type = #tpu.core_type<tc>, window_params = [{transform_indices = @transform_0, window_bounds = array<i64: 64, 128>}, {pipeline_mode = #tpu.pipeline_mode<synchronous>, transform_indices = @transform_1, window_bounds = array<i64: 128, 128>}, {transform_indices = @transform_2, window_bounds = array<i64: 64, 128>}]} {
    %c0 = arith.constant 0 : index
    %c0_0 = arith.constant 0 : index
    %0 = vector.load %arg1[%c0, %c0_0] : memref<64x128xbf16, #tpu.memory_space<vmem>>, vector<64x128xbf16>
    %c0_1 = arith.constant 0 : index
    %c0_2 = arith.constant 0 : index
    %1 = vector.load %arg2[%c0_1, %c0_2] : memref<128x128xbf16, #tpu.memory_space<vmem>>, vector<128x128xbf16>
    %cst = arith.constant dense<0.000000e+00> : vector<64x128xf32>
    %2 = tpu.matmul %0, %1, %cst {dimension_numbers = #tpu.dot_dimension_numbers<[1], [0], [0], [1], [0, 0, 1, 1], [], []>} : vector<64x128xbf16>, vector<128x128xbf16>, vector<64x128xf32> -> vector<64x128xf32>
    %3 = arith.truncf %2 : vector<64x128xf32> to vector<64x128xbf16>
    %c0_3 = arith.constant 0 : index
    %c0_4 = arith.constant 0 : index
    %4 = vector.load %arg3[%c0_3, %c0_4] : memref<64x128xbf16, #tpu.memory_space<vmem>>, vector<64x128xbf16>
    tpu.vector_store %arg3[%c0_3, %c0_4], %3 {strides = array<i32>} : memref<64x128xbf16, #tpu.memory_space<vmem>>, vector<64x128xbf16>,
    return
  }
  func.func @transform_0(%arg0: i32) -> (i32, i32) {
    %c0_i32 = arith.constant 0 : i32
    %c0_i32_0 = arith.constant 0 : i32
    return %arg0, %c0_i32 : i32, i32
  }
  func.func @transform_1(%arg0: i32) -> (i32, i32) {
    %c0_i32 = arith.constant 0 : i32
    %c0_i32_0 = arith.constant 0 : i32
    %c0_i32_1 = arith.constant 0 : i32
    return %c0_i32, %c0_i32_0 : i32, i32
  }
  func.func @transform_2(%arg0: i32) -> (i32, i32) {
    %c0_i32 = arith.constant 0 : i32
    %c0_i32_0 = arith.constant 0 : i32
    return %arg0, %c0_i32 : i32, i32
  }
}

</mosaic_0001>

<llo_original>
// kernel: tpu_custom_call.1
$region0: #{tpu_custom_call.1}
  #allocation0 [shape = 'u32[]', space=smem, size = 0x4, offset = 0x4, fixed_abs, tag = 'smem constant byte address 0x4 - core index']
  #allocation1 [shape = 'u32[144,128]{1,0:T(1,128)}', space=vmem, size = 0x12000, scoped, tag = 'internal scratch']
  %s0 = inlined_call_operand.hbm [shape: bf16[64,128], index: 0, kind: input, shape index: {}]
  %s1 = inlined_call_operand.hbm [shape: bf16[128,128], index: 1, kind: input, shape index: {}]
  %s2 = inlined_call_operand.hbm [shape: bf16[64,128], index: 2, kind: output, shape index: {}]
  %s3 = sld [smem:[#allocation0]]
  $region26: #{tpu_custom_call.1} parent=0
    _
  %s5 = ssub.s32 1, %s3
  %s6 = scalar_select 0, %s5, %s3
  $region1: #{tpu_custom_call.1} parent=0
    #allocation2 [shape = 'u8[16384]{0}', space=vmem, size = 0x4000, scoped, tag = 'input window, operand 0, single buffered']
    #allocation3 [shape = 's32[1]{0}', space=sflag, size = 0x4, scoped, tag = 'scoped memory for tpu_custom_call.1']
    #allocation4 [shape = 's32[1]{0}', space=sflag, size = 0x4, scoped, tag = 'scoped memory for tpu_custom_call.1']
    #allocation5 [shape = 'u8[32768]{0}', space=vmem, size = 0x8000, scoped, tag = 'input window, operand 1, single buffered']
    #allocation6 [shape = 's32[1]{0}', space=sflag, size = 0x4, scoped, tag = 'scoped memory for tpu_custom_call.1']
    #allocation7 [shape = 'u8[16384]{0}', space=vmem, size = 0x4000, scoped, tag = 'output window, operand 0, single buffered']
    %7 = vsyncpa [#allocation3], 0
    %8 = vsyncpa [#allocation6], 0
    %9 = vsyncpa [#allocation4], 0
    // Predicated region
    $region2: #{tpu_custom_call.1} parent=1 // pred_check
      _
    $region3: #{tpu_custom_call.1} parent=1 // pred_check_branch
      %11 = sbr.rel (0) target = $region5
    $region4: #{tpu_custom_call.1} parent=1 // pred_region
      %s13 = ssub.s32 512, 512
      %14 = vsyncadd [#allocation3], %s13
      %s15 = sshll.u32 [#allocation2], 4
      %s16 = int_to_ptr.vmem [resolvable:$true] %s15
      %21 = dma.hbm_to_vmem [thread:$0]  %s0, 512, %s16, [#allocation3], 64, 64, 4
    $region5: #{tpu_custom_call.1} parent=1 // pred_fallthru
      _
    // Predicated region
    $region6: #{tpu_custom_call.1} parent=1 // pred_check
      _
    $region7: #{tpu_custom_call.1} parent=1 // pred_check_branch
      %23 = sbr.rel (0) target = $region9
    $region8: #{tpu_custom_call.1} parent=1 // pred_region
      %s25 = ssub.s32 1024, 1024
      %26 = vsyncadd [#allocation6], %s25
      %s27 = sshll.u32 [#allocation5], 4
      %s28 = int_to_ptr.vmem [resolvable:$true] %s27
      %33 = dma.hbm_to_vmem [thread:$0]  %s1, 1024, %s28, [#allocation6], 64, 64, 4
    $region9: #{tpu_custom_call.1} parent=1 // pred_fallthru
      _
    // Predicated region
    $region10: #{tpu_custom_call.1} parent=1 // pred_check
      _
    $region11: #{tpu_custom_call.1} parent=1 // pred_check_branch
      %35 = sbr.rel (0) target = $region13
    $region12: #{tpu_custom_call.1} parent=1 // pred_region
      %36 = dma.done [#allocation3], 512
    $region13: #{tpu_custom_call.1} parent=1 // pred_fallthru
      _
    // Predicated region
    $region14: #{tpu_custom_call.1} parent=1 // pred_check
      _
    $region15: #{tpu_custom_call.1} parent=1 // pred_check_branch
      %38 = sbr.rel (0) target = $region17
    $region16: #{tpu_custom_call.1} parent=1 // pred_region
      %39 = dma.done [#allocation6], 1024
    $region17: #{tpu_custom_call.1} parent=1 // pred_fallthru
      _
    %v41 = vld [vmem:[#allocation2] sm:$0xf]
    %v42 = vld [vmem:[#allocation2 + $0x4] sm:$0xf]
    %v43 = vld [vmem:[#allocation2 + $0x8] sm:$0xf]
    %v44 = vld [vmem:[#allocation2 + $0xc] sm:$0xf]
    %v45 = vld [vmem:[#allocation2 + $0x10] sm:$0xf]
    %v46 = vld [vmem:[#allocation2 + $0x14] sm:$0xf]
    %v47 = vld [vmem:[#allocation2 + $0x18] sm:$0xf]
    %v48 = vld [vmem:[#allocation2 + $0x1c] sm:$0xf]
    %v49 = vld [vmem:[#allocation5] sm:$0xf]
    %v50 = vld [vmem:[#allocation5 + $0x4] sm:$0xf]
    %v51 = vld [vmem:[#allocation5 + $0x8] sm:$0xf]
    %v52 = vld [vmem:[#allocation5 + $0xc] sm:$0xf]
    %v53 = vld [vmem:[#allocation5 + $0x10] sm:$0xf]
    %v54 = vld [vmem:[#allocation5 + $0x14] sm:$0xf]
    %v55 = vld [vmem:[#allocation5 + $0x18] sm:$0xf]
    %v56 = vld [vmem:[#allocation5 + $0x1c] sm:$0xf]
    %v57 = vld [vmem:[#allocation5 + $0x20] sm:$0xf]
    %v58 = vld [vmem:[#allocation5 + $0x24] sm:$0xf]
    %v59 = vld [vmem:[#allocation5 + $0x28] sm:$0xf]
    %v60 = vld [vmem:[#allocation5 + $0x2c] sm:$0xf]
    %v61 = vld [vmem:[#allocation5 + $0x30] sm:$0xf]
    %v62 = vld [vmem:[#allocation5 + $0x34] sm:$0xf]
    %v63 = vld [vmem:[#allocation5 + $0x38] sm:$0xf]
    %v64 = vld [vmem:[#allocation5 + $0x3c] sm:$0xf]
    %v73 = vunpack.c.l.b16 %v41
    %v74 = vunpack.c.l.b16 %v42
    %v75 = vunpack.c.l.b16 %v43
    %v76 = vunpack.c.l.b16 %v44
    %v77 = vunpack.c.l.b16 %v45
    %v78 = vunpack.c.l.b16 %v46
    %v79 = vunpack.c.l.b16 %v47
    %v80 = vunpack.c.l.b16 %v48
    %v81 = vpack.c.b16 %v74, %v73
    %v82 = vpack.c.b16 %v76, %v75
    %v83 = vpack.c.b16 %v78, %v77
    %v84 = vpack.c.b16 %v80, %v79
    %v105 = vunpack.c.l.b16 %v49
    %v106 = vunpack.c.l.b16 %v50
    %v107 = vunpack.c.l.b16 %v51
    %v108 = vunpack.c.l.b16 %v52
    %v109 = vunpack.c.l.b16 %v53
    %v110 = vunpack.c.l.b16 %v54
    %v111 = vunpack.c.l.b16 %v55
    %v112 = vunpack.c.l.b16 %v56
    %v113 = vunpack.c.l.b16 %v57
    %v114 = vunpack.c.l.b16 %v58
    %v115 = vunpack.c.l.b16 %v59
    %v116 = vunpack.c.l.b16 %v60
    %v117 = vunpack.c.l.b16 %v61
    %v118 = vunpack.c.l.b16 %v62
    %v119 = vunpack.c.l.b16 %v63
    %v120 = vunpack.c.l.b16 %v64
    %v121 = vpack.c.b16 %v106, %v105
    %v122 = vpack.c.b16 %v108, %v107
    %v123 = vpack.c.b16 %v110, %v109
    %v124 = vpack.c.b16 %v112, %v111
    %v125 = vpack.c.b16 %v114, %v113
    %v126 = vpack.c.b16 %v116, %v115
    %v127 = vpack.c.b16 %v118, %v117
    %v128 = vpack.c.b16 %v120, %v119
    %137 = vmatprep.subr.bf16.mxu0 0
    %138 = vmatpush1.bf16.msra.mxu0 %v121
    %139 = vmatprep.subr.bf16.mxu0 0
    %140 = vmatpush1.bf16.msra.mxu0 %v122
    %141 = vmatprep.subr.bf16.mxu0 0
    %142 = vmatpush1.bf16.msra.mxu0 %v123
    %143 = vmatprep.subr.bf16.mxu0 0
    %144 = vmatpush1.bf16.msra.mxu0 %v124
    %145 = vmatprep.subr.bf16.mxu0 0
    %146 = vmatpush1.bf16.msra.mxu0 %v125
    %147 = vmatprep.subr.bf16.mxu0 0
    %148 = vmatpush1.bf16.msra.mxu0 %v126
    %149 = vmatprep.subr.bf16.mxu0 0
    %150 = vmatpush1.bf16.msra.mxu0 %v127
    %151 = vmatprep.subr.bf16.mxu0 0
    %152 = vmatpush1.bf16.msra.mxu0 %v128
    %153 = vmatprep.subr.bf16.mxu0 0
    %154 = vmatpush1.bf16.msra.mxu0 0
    %155 = vmatprep.subr.bf16.mxu0 0
    %156 = vmatpush1.bf16.msra.mxu0 0
    %157 = vmatprep.subr.bf16.mxu0 0
    %158 = vmatpush1.bf16.msra.mxu0 0
    %159 = vmatprep.subr.bf16.mxu0 0
    %160 = vmatpush1.bf16.msra.mxu0 0
    %161 = vmatprep.subr.bf16.mxu0 0
    %162 = vmatpush1.bf16.msra.mxu0 0
    %163 = vmatprep.subr.bf16.mxu0 0
    %164 = vmatpush1.bf16.msra.mxu0 0
    %165 = vmatprep.subr.bf16.mxu0 0
    %166 = vmatpush1.bf16.msra.mxu0 0
    %167 = vmatprep.subr.bf16.mxu0 0
    %168 = vmatpush1.bf16.msra.mxu0 0
    %169 = vmatprep.mubr.bf16.mxu0 0
    %170 = vmatmul.mubr.bf16.gmra.mrb[0].mxu0 %v81
    %v171 = vpop.f32.mrb[0].mxu0
    %v172 = vadd.f32 0.0, %v171
    %v173 = vpop.f32.mrb[0].mxu0
    %v174 = vpop.f32.mrb[0].mxu0
    %v175 = vadd.f32 0.0, %v174
    %v176 = vpop.f32.mrb[0].mxu0
    %177 = vmatprep.mubr.bf16.mxu0 0
    %178 = vmatmul.mubr.bf16.gmra.mrb[0].mxu0 %v82
    %v179 = vpop.f32.mrb[0].mxu0
    %v180 = vadd.f32 0.0, %v179
    %v181 = vpop.f32.mrb[0].mxu0
    %v182 = vpop.f32.mrb[0].mxu0
    %v183 = vadd.f32 0.0, %v182
    %v184 = vpop.f32.mrb[0].mxu0
    %185 = vmatprep.mubr.bf16.mxu0 0
    %186 = vmatmul.mubr.bf16.gmra.mrb[0].mxu0 %v83
    %v187 = vpop.f32.mrb[0].mxu0
    %v188 = vadd.f32 0.0, %v187
    %v189 = vpop.f32.mrb[0].mxu0
    %v190 = vpop.f32.mrb[0].mxu0
    %v191 = vadd.f32 0.0, %v190
    %v192 = vpop.f32.mrb[0].mxu0
    %193 = vmatprep.mubr.bf16.mxu0 0
    %194 = vmatmul.mubr.bf16.gmra.mrb[0].mxu0 %v84
    %v195 = vpop.f32.mrb[0].mxu0
    %v196 = vadd.f32 0.0, %v195
    %v197 = vpop.f32.mrb[0].mxu0
    %v198 = vpop.f32.mrb[0].mxu0
    %v199 = vadd.f32 0.0, %v198
    %v200 = vpop.f32.mrb[0].mxu0
    %201 = vdwg.mxu0
    %v202 = vpack.c.bf16 %v175, %v172
    %v203 = vpack.c.bf16 %v183, %v180
    %v204 = vpack.c.bf16 %v191, %v188
    %v205 = vpack.c.bf16 %v199, %v196
    %v210 = vunpack.c.l.b16 %v202
    %v211 = vunpack.c.h.b16 %v202
    %v212 = vunpack.c.l.b16 %v203
    %v213 = vunpack.c.h.b16 %v203
    %v214 = vunpack.c.l.b16 %v204
    %v215 = vunpack.c.h.b16 %v204
    %v216 = vunpack.c.l.b16 %v205
    %v217 = vunpack.c.h.b16 %v205
    %v218 = vpack.c.b16 %v210, %v210
    %v219 = vpack.c.b16 %v211, %v211
    %v220 = vpack.c.b16 %v212, %v212
    %v221 = vpack.c.b16 %v213, %v213
    %v222 = vpack.c.b16 %v214, %v214
    %v223 = vpack.c.b16 %v215, %v215
    %v224 = vpack.c.b16 %v216, %v216
    %v225 = vpack.c.b16 %v217, %v217
    %234 = vst [vmem:[#allocation7] sm:$0xf] %v218
    %235 = vst [vmem:[#allocation7 + $0x4] sm:$0xf] %v219
    %236 = vst [vmem:[#allocation7 + $0x8] sm:$0xf] %v220
    %237 = vst [vmem:[#allocation7 + $0xc] sm:$0xf] %v221
    %238 = vst [vmem:[#allocation7 + $0x10] sm:$0xf] %v222
    %239 = vst [vmem:[#allocation7 + $0x14] sm:$0xf] %v223
    %240 = vst [vmem:[#allocation7 + $0x18] sm:$0xf] %v224
    %241 = vst [vmem:[#allocation7 + $0x1c] sm:$0xf] %v225
    // Predicated region
    $region18: #{tpu_custom_call.1} parent=1 // pred_check
      _
    $region19: #{tpu_custom_call.1} parent=1 // pred_check_branch
      %243 = sbr.rel (0) target = $region21
    $region20: #{tpu_custom_call.1} parent=1 // pred_region
      %s245 = ssub.s32 512, 512
      %246 = vsyncadd [#allocation4], %s245
      %s247 = sshll.u32 [#allocation7], 4
      %s248 = int_to_ptr.vmem [resolvable:$true] %s247
      %253 = dma.vmem_to_hbm [thread:$0]  %s248, 512, %s2, [#allocation4], 64, 64, 4
    $region21: #{tpu_custom_call.1} parent=1 // pred_fallthru
      _
    // Predicated region
    $region22: #{tpu_custom_call.1} parent=1 // pred_check
      _
    $region23: #{tpu_custom_call.1} parent=1 // pred_check_branch
      %255 = sbr.rel (0) target = $region25
    $region24: #{tpu_custom_call.1} parent=1 // pred_region
      %256 = dma.done [#allocation4], 512
    $region25: #{tpu_custom_call.1} parent=1 // pred_fallthru
      _
    %257 = vsyncpa [#allocation3], 1
    %258 = vsyncpa [#allocation6], 1
    %259 = vsyncpa [#allocation4], 1

</llo_original>
